<compile_context>
chip_gen: v7x
topology: tpu7x:2x2x1
jax: 0.10.0
libtpu: 0.0.40
codegen_flags: <defaults>
</compile_context>

<pallas_src>
import functools

import jax
import jax.numpy as jnp
import numpy as np
from jax.experimental import pallas as pl
from jax.experimental.pallas import tpu as pltpu

_LN_HALF = -0.693147180559      # threshold hard-coded in the PyTorch module
_LANES = 128                    # logits lanes per row (64 samples x 2 classes)
_SPR = _LANES // 2              # samples per interleaved logits row
_TR_MAX = 2048                  # logit rows per grid step  (= 128K samples/step)
_MIN_PAR_ROWS = 512             # split >=2 tiles above this (lets v7x use 2 TCs)


def _round_up(x, m):
    return ((x + m - 1) // m) * m


def _cdiv(a, b):
    return (a + b - 1) // b


def _ls_loss_kernel(batch, with_fp, need_mask, c1, c2, c3,
                    logits_ref, labels_ref, *out_refs):
    """One batch tile.

    logits_ref: (tr, 128) native dtype; row r holds 64 consecutive samples with
                the two class logits interleaved on lanes (2j, 2j+1).
    labels_ref: (tr, 64) int32; lane j of row r is the label of the same sample.
    out_refs:   per-tile partial sums, each (8, 64) f32 (all rows identical);
                combined + FP-renormalised in the JAX wrapper.
    """
    tr = logits_ref.shape[0]
    x = logits_ref[...].astype(jnp.float32)                  # (tr, 128)
    lab = labels_ref[...]                                    # (tr, 64) int32

    # d[r, j] = x1 - x0 for sample 64r+j: lane de-interleave via the idle MXU
    # with a constant +/-1 matrix.  The hi/mid/lo split keeps the result exact
    # (<= ~2^-24 rel. error) even if the f32 matmul is internally bf16-passed.
    rr = jax.lax.broadcasted_iota(jnp.int32, (_LANES, _SPR), 0)
    cc = jax.lax.broadcasted_iota(jnp.int32, (_LANES, _SPR), 1)
    dmat = ((rr == 2 * cc + 1).astype(jnp.float32)
            - (rr == 2 * cc).astype(jnp.float32))            # (128, 64)
    x_hi = x.astype(jnp.bfloat16).astype(jnp.float32)
    r1 = x - x_hi
    x_mid = r1.astype(jnp.bfloat16).astype(jnp.float32)
    x_lo = r1 - x_mid
    d = (jnp.dot(x_hi, dmat, preferred_element_type=jnp.float32)
         + jnp.dot(x_mid, dmat, preferred_element_type=jnp.float32)
         + jnp.dot(x_lo, dmat, preferred_element_type=jnp.float32))  # (tr, 64)

    # 2-class log-softmax via one stable softplus: sp = log(1 + e^d)
    sp = jnp.maximum(d, 0.0) + jnp.log(1.0 + jnp.exp(-jnp.abs(d)))
    logp1 = d - sp                                           # log P(class 1)

    # w_k * mean_j KL_j  ==  c1[k] + c2[k]*sp + c3[k]*d   (k = label)
    is1 = lab > 0
    wkl = (jnp.where(is1, c1[1], c1[0])
           + jnp.where(is1, c2[1], c2[0]) * sp
           + jnp.where(is1, c3[1], c3[0]) * d)               # (tr, 64)

    valid = None
    if need_mask:
        row = jax.lax.broadcasted_iota(jnp.int32, (tr, _SPR), 0)
        col = jax.lax.broadcasted_iota(jnp.int32, (tr, _SPR), 1)
        samp = (pl.program_id(0) * tr + row) * _SPR + col
        valid = samp < batch
        wkl = jnp.where(valid, wkl, 0.0)

    def _emit(ref, v):                                       # (1, 64) -> (8, 64)
        ref[...] = jnp.broadcast_to(v, ref.shape)

    if with_fp:
        n_ref, sfp_ref, stot_ref = out_refs
        fp = jnp.logical_and(jnp.logical_not(is1), logp1 >= _LN_HALF)
        if need_mask:
            fp = jnp.logical_and(fp, valid)
        fpf = fp.astype(jnp.float32)
        # Only sublane-axis (cheap) reductions here; cross-lane reduce happens
        # once, on a tiny array, in the wrapper.
        _emit(n_ref, jnp.sum(fpf, axis=0, keepdims=True))
        _emit(sfp_ref, jnp.sum(wkl * fpf, axis=0, keepdims=True))
        _emit(stot_ref, jnp.sum(wkl, axis=0, keepdims=True))
    else:
        (stot_ref,) = out_refs
        _emit(stot_ref, jnp.sum(wkl, axis=0, keepdims=True))


def make_label_smoothing_loss(class_confidence_values=(1.0, 1.0),
                              class_weights=(1.0, 1.0),
                              false_positive_loss_factor=1.5):
    """Builds the (soft_distribs, class_weights) tables like the PyTorch
    __init__ and returns (loss_fn, soft_distribs, class_weights, fp_factor)."""
    amount = np.asarray(class_confidence_values, np.float64)
    assert amount.ndim == 1 and len(amount) > 1
    assert len(class_weights) == len(amount)
    assert np.all(amount >= 0) and np.all(amount <= 1)
    assert false_positive_loss_factor > 0
    num_classes = len(amount)
    fp_factor = float(false_positive_loss_factor)
    # TODO(synk): general num_classes > 2 path (soft-label MXU matmul); the
    # false-positive term in the reference already assumes binary classes.
    assert num_classes == 2, "optimized kernel implements the binary case"

    soft_distribs = np.zeros((num_classes, num_classes), np.float64)
    for i in range(num_classes):
        other = (1.0 - amount[i]) / (num_classes - 1)
        soft_distribs[i, :] = other
        soft_distribs[i, i] = amount[i]
    cls_w = np.asarray(class_weights, np.float64)

    # sum_j sd[k,j] * log sd[k,j]  (0*log0 := 0, matching F.kl_div / xlogy)
    ent = np.where(soft_distribs > 0,
                   soft_distribs * np.log(np.where(soft_distribs > 0,
                                                   soft_distribs, 1.0)),
                   0.0).sum(axis=1)
    inv_c = 1.0 / num_classes
    c1 = tuple(float(inv_c * cls_w[k] * ent[k]) for k in range(2))
    c2 = tuple(float(inv_c * cls_w[k]) for k in range(2))
    c3 = tuple(float(-inv_c * cls_w[k] * soft_distribs[k, 1]) for k in range(2))
    with_fp = fp_factor != 1.0

    def _loss(output, labels):
        b, c = output.shape
        assert c == num_classes
        rows_needed = _cdiv(b, _SPR)
        if rows_needed > _TR_MAX:
            num_tiles = _cdiv(rows_needed, _TR_MAX)
        elif rows_needed >= 2 * _MIN_PAR_ROWS:
            num_tiles = 2            # lets v7x's two TensorCores split the work
        else:
            num_tiles = 1
        if num_tiles == 1:
            tr = rows_needed
        else:
            tr = _round_up(_cdiv(rows_needed, num_tiles), 8)
        rows_total = num_tiles * tr
        b_pad = rows_total * _SPR
        need_mask = b_pad != b

        logits = output                       # keep native dtype (bf16 halves HBM)
        lbl = labels.astype(jnp.int32)
        if need_mask:
            logits = jnp.pad(logits, ((0, b_pad - b), (0, 0)))
            lbl = jnp.pad(lbl, ((0, b_pad - b),))
        # Free, contiguous reshapes (no transpose / relayout pre-pass).
        logits = logits.reshape(rows_total, _LANES)   # class-interleaved lanes
        lbl = lbl.reshape(rows_total, _SPR)

        n_out = 3 if with_fp else 1
        kernel = functools.partial(_ls_loss_kernel, b, with_fp, need_mask,
                                   c1, c2, c3)
        outs = pl.pallas_call(
            kernel,
            out_shape=tuple(jax.ShapeDtypeStruct((num_tiles * 8, _SPR),
                                                 jnp.float32)
                            for _ in range(n_out)),
            grid_spec=pltpu.PrefetchScalarGridSpec(
                num_scalar_prefetch=0,
                grid=(num_tiles,),
                in_specs=[
                    pl.BlockSpec((tr, _LANES), lambda i: (i, 0)),
                    pl.BlockSpec((tr, _SPR), lambda i: (i, 0)),
                ],
                out_specs=tuple(pl.BlockSpec((8, _SPR), lambda i: (i, 0))
                                for _ in range(n_out)),
            ),
            compiler_params=pltpu.CompilerParams(
                dimension_semantics=("parallel",),
                vmem_limit_bytes=48 * 1024 * 1024),
        )(logits, lbl)

        def _tile_sum(o):
            return jnp.sum(o.reshape(num_tiles, 8, _SPR)[:, 0, :])

        bf = float(b)
        if with_fp:
            n_fp = _tile_sum(outs[0])
            s_fp = _tile_sum(outs[1])
            s_tot = _tile_sum(outs[2])
            s_non = s_tot - s_fp
            denom = bf - n_fp
            # NOTE: the PyTorch reference divides by zero when *every* sample is
            # a false positive; here that case falls back to adj == 1 (s_non==0).
            safe = denom > 0.5
            adj = jnp.where(safe,
                            (bf - n_fp * fp_factor) / jnp.where(safe, denom, 1.0),
                            1.0)
            total = fp_factor * s_fp + adj * s_non
        else:
            total = _tile_sum(outs[0])
        return total / bf

    return jax.jit(_loss), soft_distribs, cls_w, fp_factor


def _reference_loss(output, labels, soft_distribs, class_weights, fp_factor):
    """Pure numpy re-implementation of the PyTorch forward, for sanity check."""
    output = np.asarray(output, np.float64)
    labels = np.asarray(labels, np.int64)
    soft_distribs = np.asarray(soft_distribs, np.float64)
    class_weights = np.asarray(class_weights, np.float64).reshape(-1)
    B = len(labels)

    weights = class_weights[labels].copy()
    soft_labels = soft_distribs[labels]
    m = output.max(axis=1, keepdims=True)
    logp = output - m - np.log(np.exp(output - m).sum(axis=1, keepdims=True))
    with np.errstate(divide="ignore", invalid="ignore"):
        kl = np.where(soft_labels > 0,
                      soft_labels * (np.log(np.where(soft_labels > 0,
                                                     soft_labels, 1.0)) - logp),
                      0.0)
    kl_mean = kl.mean(axis=1)
    if fp_factor != 1.0:
        idx = (labels == 0) & (logp[:, 1] >= _LN_HALF)
        n = idx.sum()
        weights[idx] *= fp_factor
        adj = (B - n * fp_factor) / (B - n)
        weights[~idx] *= adj
    return (weights * kl_mean).sum() / B


if __name__ == "__main__":
    key = jax.random.PRNGKey(0)
    k1, k2, k3, k4 = jax.random.split(key, 4)

    loss_fn, soft_distribs, cls_w, fp_factor = make_label_smoothing_loss(
        class_confidence_values=[0.9, 0.95],
        class_weights=[1.0, 2.0],
        false_positive_loss_factor=1.5,
    )

    # Small shape consistent with the module: (batch, num_classes=2).
    B, C = 200, 2
    output = jax.random.normal(k1, (B, C), dtype=jnp.float32)
    labels = jax.random.randint(k2, (B,), 0, C, dtype=jnp.int32)
    loss = jax.block_until_ready(loss_fn(output, labels))
    ref = _reference_loss(np.asarray(output), np.asarray(labels),
                          soft_distribs, cls_w, fp_factor)
    assert np.allclose(float(loss), ref, rtol=5e-4, atol=1e-6), (float(loss), ref)

    # Larger batch exercising the multi-tile / padded / parallel-grid path.
    B2 = 150_000
    output2 = jax.random.normal(k3, (B2, C), dtype=jnp.float32)
    labels2 = jax.random.randint(k4, (B2,), 0, C, dtype=jnp.int32)
    loss2 = jax.block_until_ready(loss_fn(output2, labels2))
    ref2 = _reference_loss(np.asarray(output2), np.asarray(labels2),
                           soft_distribs, cls_w, fp_factor)
    assert np.allclose(float(loss2), ref2, rtol=5e-4, atol=1e-6), (float(loss2), ref2)

    print("KERNEL_OK")
</pallas_src>

<mosaic_0001>
module attributes {stable_mosaic.version = 11 : i64} {
  func.func @_ls_loss_kernel(%arg0: i32, %arg1: memref<4x128xf32, #tpu.memory_space<vmem>>, %arg2: memref<4x64xi32, #tpu.memory_space<vmem>>, %arg3: memref<8x64xf32, #tpu.memory_space<vmem>>, %arg4: memref<8x64xf32, #tpu.memory_space<vmem>>, %arg5: memref<8x64xf32, #tpu.memory_space<vmem>>) attributes {dimension_semantics = [#tpu.dimension_semantics<parallel>], iteration_bounds = array<i64: 1>, scalar_prefetch = 0 : i64, scratch_operands = 0 : i64, tpu.core_type = #tpu.core_type<tc>, window_params = [{transform_indices = @transform_0, window_bounds = array<i64: 4, 128>}, {transform_indices = @transform_1, window_bounds = array<i64: 4, 64>}, {transform_indices = @transform_2, window_bounds = array<i64: 8, 64>}, {transform_indices = @transform_3, window_bounds = array<i64: 8, 64>}, {transform_indices = @transform_4, window_bounds = array<i64: 8, 64>}]} {
    %c0 = arith.constant 0 : index
    %c0_0 = arith.constant 0 : index
    %0 = vector.load %arg1[%c0, %c0_0] : memref<4x128xf32, #tpu.memory_space<vmem>>, vector<4x128xf32>
    %c0_1 = arith.constant 0 : index
    %c0_2 = arith.constant 0 : index
    %1 = vector.load %arg2[%c0_1, %c0_2] : memref<4x64xi32, #tpu.memory_space<vmem>>, vector<4x64xi32>
    %2 = tpu.iota {dimensions = array<i32: 0>} : vector<128x64xi32>
    %3 = tpu.iota {dimensions = array<i32: 1>} : vector<128x64xi32>
    %c2_i32 = arith.constant 2 : i32
    %4 = vector.broadcast %c2_i32 : i32 to vector<128x64xi32>
    %5 = arith.muli %4, %3 : vector<128x64xi32>
    %c1_i32 = arith.constant 1 : i32
    %6 = vector.broadcast %c1_i32 : i32 to vector<128x64xi32>
    %7 = arith.addi %5, %6 : vector<128x64xi32>
    %8 = arith.cmpi eq, %2, %7 : vector<128x64xi32>
    %9 = arith.extui %8 : vector<128x64xi1> to vector<128x64xi32>
    %10 = arith.sitofp %9 : vector<128x64xi32> to vector<128x64xf32>
    %c2_i32_3 = arith.constant 2 : i32
    %11 = vector.broadcast %c2_i32_3 : i32 to vector<128x64xi32>
    %12 = arith.muli %11, %3 : vector<128x64xi32>
    %13 = arith.cmpi eq, %2, %12 : vector<128x64xi32>
    %14 = arith.extui %13 : vector<128x64xi1> to vector<128x64xi32>
    %15 = arith.sitofp %14 : vector<128x64xi32> to vector<128x64xf32>
    %16 = arith.subf %10, %15 : vector<128x64xf32>
    %17 = arith.truncf %0 : vector<4x128xf32> to vector<4x128xbf16>
    %18 = arith.extf %17 : vector<4x128xbf16> to vector<4x128xf32>
    %19 = arith.subf %0, %18 : vector<4x128xf32>
    %20 = arith.truncf %19 : vector<4x128xf32> to vector<4x128xbf16>
    %21 = arith.extf %20 : vector<4x128xbf16> to vector<4x128xf32>
    %22 = arith.subf %19, %21 : vector<4x128xf32>
    %cst = arith.constant dense<0.000000e+00> : vector<4x64xf32>
    %23 = tpu.matmul %18, %16, %cst {dimension_numbers = #tpu.dot_dimension_numbers<[1], [0], [0], [1], [0, 0, 1, 1], [], []>} : vector<4x128xf32>, vector<128x64xf32>, vector<4x64xf32> -> vector<4x64xf32>
    %cst_4 = arith.constant dense<0.000000e+00> : vector<4x64xf32>
    %24 = tpu.matmul %21, %16, %cst_4 {dimension_numbers = #tpu.dot_dimension_numbers<[1], [0], [0], [1], [0, 0, 1, 1], [], []>} : vector<4x128xf32>, vector<128x64xf32>, vector<4x64xf32> -> vector<4x64xf32>
    %25 = arith.addf %23, %24 : vector<4x64xf32>
    %cst_5 = arith.constant dense<0.000000e+00> : vector<4x64xf32>
    %26 = tpu.matmul %22, %16, %cst_5 {dimension_numbers = #tpu.dot_dimension_numbers<[1], [0], [0], [1], [0, 0, 1, 1], [], []>} : vector<4x128xf32>, vector<128x64xf32>, vector<4x64xf32> -> vector<4x64xf32>
    %27 = arith.addf %25, %26 : vector<4x64xf32>
    %cst_6 = arith.constant 0.000000e+00 : f32
    %28 = vector.broadcast %cst_6 : f32 to vector<4x64xf32>
    %29 = arith.maximumf %27, %28 : vector<4x64xf32>
    %30 = math.absf %27 : vector<4x64xf32>
    %cst_7 = arith.constant 0.000000e+00 : f32
    %31 = vector.broadcast %cst_7 : f32 to vector<4x64xf32>
    %32 = arith.subf %31, %30 : vector<4x64xf32>
    %33 = math.exp %32 : vector<4x64xf32>
    %cst_8 = arith.constant 1.000000e+00 : f32
    %34 = vector.broadcast %cst_8 : f32 to vector<4x64xf32>
    %35 = arith.addf %34, %33 : vector<4x64xf32>
    %36 = math.log %35 : vector<4x64xf32>
    %37 = arith.addf %29, %36 : vector<4x64xf32>
    %38 = arith.subf %27, %37 : vector<4x64xf32>
    %c0_i32 = arith.constant 0 : i32
    %39 = vector.broadcast %c0_i32 : i32 to vector<4x64xi32>
    %40 = arith.cmpi sgt, %1, %39 : vector<4x64xi32>
    %cst_9 = arith.constant -0.198515236 : f32
    %cst_10 = arith.constant -0.162541494 : f32
    %41 = vector.broadcast %cst_9 : f32 to vector<4x64xf32>
    %42 = vector.broadcast %cst_10 : f32 to vector<4x64xf32>
    %43 = arith.select %40, %41, %42 : vector<4x64xi1>, vector<4x64xf32>
    %cst_11 = arith.constant 1.000000e+00 : f32
    %cst_12 = arith.constant 5.000000e-01 : f32
    %44 = vector.broadcast %cst_11 : f32 to vector<4x64xf32>
    %45 = vector.broadcast %cst_12 : f32 to vector<4x64xf32>
    %46 = arith.select %40, %44, %45 : vector<4x64xi1>, vector<4x64xf32>
    %47 = arith.mulf %46, %37 : vector<4x64xf32>
    %48 = arith.addf %43, %47 : vector<4x64xf32>
    %cst_13 = arith.constant -0.949999988 : f32
    %cst_14 = arith.constant -5.000000e-02 : f32
    %49 = vector.broadcast %cst_13 : f32 to vector<4x64xf32>
    %50 = vector.broadcast %cst_14 : f32 to vector<4x64xf32>
    %51 = arith.select %40, %49, %50 : vector<4x64xi1>, vector<4x64xf32>
    %52 = arith.mulf %51, %27 : vector<4x64xf32>
    %53 = arith.addf %48, %52 : vector<4x64xf32>
    %54 = tpu.iota {dimensions = array<i32: 0>} : vector<4x64xi32>
    %55 = tpu.iota {dimensions = array<i32: 1>} : vector<4x64xi32>
    %c4_i32 = arith.constant 4 : i32
    %56 = arith.muli %arg0, %c4_i32 : i32
    %57 = vector.broadcast %56 : i32 to vector<4x64xi32>
    %58 = arith.addi %57, %54 : vector<4x64xi32>
    %c64_i32 = arith.constant 64 : i32
    %59 = vector.broadcast %c64_i32 : i32 to vector<4x64xi32>
    %60 = arith.muli %58, %59 : vector<4x64xi32>
    %61 = arith.addi %60, %55 : vector<4x64xi32>
    %c200_i32 = arith.constant 200 : i32
    %62 = vector.broadcast %c200_i32 : i32 to vector<4x64xi32>
    %63 = arith.cmpi slt, %61, %62 : vector<4x64xi32>
    %cst_15 = arith.constant 0.000000e+00 : f32
    %64 = vector.broadcast %cst_15 : f32 to vector<4x64xf32>
    %65 = arith.select %63, %53, %64 : vector<4x64xi1>, vector<4x64xf32>
    %cst_16 = arith.constant dense<true> : vector<4x64xi1>
    %66 = arith.xori %40, %cst_16 : vector<4x64xi1>
    %cst_17 = arith.constant -0.693147182 : f32
    %67 = vector.broadcast %cst_17 : f32 to vector<4x64xf32>
    %68 = arith.cmpf oge, %38, %67 : vector<4x64xf32>
    %69 = arith.andi %66, %68 : vector<4x64xi1>
    %70 = arith.andi %69, %63 : vector<4x64xi1>
    %71 = arith.extui %70 : vector<4x64xi1> to vector<4x64xi32>
    %72 = arith.sitofp %71 : vector<4x64xi32> to vector<4x64xf32>
    %cst_18 = arith.constant dense<0.000000e+00> : vector<64xf32>
    %73 = vector.multi_reduction <add>, %72, %cst_18 [0] : vector<4x64xf32> to vector<64xf32>
    %74 = vector.shape_cast %73 : vector<64xf32> to vector<1x64xf32>
    %75 = vector.shape_cast %74 : vector<1x64xf32> to vector<1x64xf32>
    %76 = vector.broadcast %75 : vector<1x64xf32> to vector<8x64xf32>
    %c0_19 = arith.constant 0 : index
    %c0_20 = arith.constant 0 : index
    %77 = vector.load %arg3[%c0_19, %c0_20] : memref<8x64xf32, #tpu.memory_space<vmem>>, vector<8x64xf32>
    tpu.vector_store %arg3[%c0_19, %c0_20], %76 {strides = array<i32>} : memref<8x64xf32, #tpu.memory_space<vmem>>, vector<8x64xf32>,
    %78 = arith.mulf %65, %72 : vector<4x64xf32>
    %cst_21 = arith.constant dense<0.000000e+00> : vector<64xf32>
    %79 = vector.multi_reduction <add>, %78, %cst_21 [0] : vector<4x64xf32> to vector<64xf32>
    %80 = vector.shape_cast %79 : vector<64xf32> to vector<1x64xf32>
    %81 = vector.shape_cast %80 : vector<1x64xf32> to vector<1x64xf32>
    %82 = vector.broadcast %81 : vector<1x64xf32> to vector<8x64xf32>
    %c0_22 = arith.constant 0 : index
    %c0_23 = arith.constant 0 : index
    %83 = vector.load %arg4[%c0_22, %c0_23] : memref<8x64xf32, #tpu.memory_space<vmem>>, vector<8x64xf32>
    tpu.vector_store %arg4[%c0_22, %c0_23], %82 {strides = array<i32>} : memref<8x64xf32, #tpu.memory_space<vmem>>, vector<8x64xf32>,
    %cst_24 = arith.constant dense<0.000000e+00> : vector<64xf32>
    %84 = vector.multi_reduction <add>, %65, %cst_24 [0] : vector<4x64xf32> to vector<64xf32>
    %85 = vector.shape_cast %84 : vector<64xf32> to vector<1x64xf32>
    %86 = vector.shape_cast %85 : vector<1x64xf32> to vector<1x64xf32>
    %87 = vector.broadcast %86 : vector<1x64xf32> to vector<8x64xf32>
    %c0_25 = arith.constant 0 : index
    %c0_26 = arith.constant 0 : index
    %88 = vector.load %arg5[%c0_25, %c0_26] : memref<8x64xf32, #tpu.memory_space<vmem>>, vector<8x64xf32>
    tpu.vector_store %arg5[%c0_25, %c0_26], %87 {strides = array<i32>} : memref<8x64xf32, #tpu.memory_space<vmem>>, vector<8x64xf32>,
    return
  }
  func.func @transform_0(%arg0: i32) -> (i32, i32) {
    %c0_i32 = arith.constant 0 : i32
    %c0_i32_0 = arith.constant 0 : i32
    return %arg0, %c0_i32 : i32, i32
  }
  func.func @transform_1(%arg0: i32) -> (i32, i32) {
    %c0_i32 = arith.constant 0 : i32
    %c0_i32_0 = arith.constant 0 : i32
    return %arg0, %c0_i32 : i32, i32
  }
  func.func @transform_2(%arg0: i32) -> (i32, i32) {
    %c0_i32 = arith.constant 0 : i32
    %c0_i32_0 = arith.constant 0 : i32
    return %arg0, %c0_i32 : i32, i32
  }
  func.func @transform_3(%arg0: i32) -> (i32, i32) {
    %c0_i32 = arith.constant 0 : i32
    %c0_i32_0 = arith.constant 0 : i32
    return %arg0, %c0_i32 : i32, i32
  }
  func.func @transform_4(%arg0: i32) -> (i32, i32) {
    %c0_i32 = arith.constant 0 : i32
    %c0_i32_0 = arith.constant 0 : i32
    return %arg0, %c0_i32 : i32, i32
  }
}

</mosaic_0001>

<llo_original>
// kernel: _loss.1
$region0: #{_loss.1}
  #allocation0 [shape = 'u32[]', space=smem, size = 0x4, offset = 0x4, fixed_abs, tag = 'smem constant byte address 0x4 - core index']
  #allocation1 [shape = 'u32[144,128]{1,0:T(1,128)}', space=vmem, size = 0x12000, scoped, tag = 'internal scratch']
  %s0 = inlined_call_operand.vmem [shape: f32[4,128], index: 0, kind: input, shape index: {}]
  %s1 = inlined_call_operand.vmem [shape: s32[4,64], index: 1, kind: input, shape index: {}]
  %s2 = inlined_call_operand.vmem [shape: f32[8,64], index: 2, kind: output, shape index: {0}]
  %s3 = inlined_call_operand.vmem [shape: f32[8,64], index: 3, kind: output, shape index: {1}]
  %s4 = inlined_call_operand.vmem [shape: f32[8,64], index: 4, kind: output, shape index: {2}]
  %5 = xla_tuple %s2, %s3, %s4
  %s6 = sld [smem:[#allocation0]]
  $region34: #{_loss.1} parent=0
    _
  %s8 = ssub.s32 1, %s6
  %s9 = scalar_select 0, %s8, %s6
  // Predicated region
  $region2: #{_loss.1} parent=0 // pred_check
    _
  $region3: #{_loss.1} parent=0 // pred_check_branch
    %11 = sbr.rel (0) target = $region5
  $region4: #{_loss.1} parent=0 // pred_region
    _
  $region5: #{_loss.1} parent=0 // pred_fallthru
    _
  // Predicated region
  $region6: #{_loss.1} parent=0 // pred_check
    _
  $region7: #{_loss.1} parent=0 // pred_check_branch
    %13 = sbr.rel (0) target = $region9
  $region8: #{_loss.1} parent=0 // pred_region
    _
  $region9: #{_loss.1} parent=0 // pred_fallthru
    _
  %v14 = vld [vmem:[%s0] sm:$0xf]
  %v15 = vld [vmem:[%s1] sm:$0xf]
  %v16 = vlaneseq
  %v17 = vshrl.u32 %v16, 7
  %v18 = vadd.s32 %v17, 8
  %v19 = vadd.s32 %v17, 16
  %v20 = vadd.s32 %v17, 24
  %v21 = vadd.s32 %v17, 32
  %v22 = vadd.s32 %v17, 40
  %v23 = vadd.s32 %v17, 48
  %v24 = vadd.s32 %v17, 56
  %v25 = vadd.s32 %v17, 64
  %v26 = vadd.s32 %v17, 72
  %v27 = vadd.s32 %v17, 80
  %v28 = vadd.s32 %v17, 88
  %v29 = vadd.s32 %v17, 96
  %v30 = vadd.s32 %v17, 104
  %v31 = vadd.s32 %v17, 112
  %v32 = vadd.s32 %v17, 120
  %v33 = vlaneseq
  %v34 = vand.u32 %v33, 127
  %v35 = vmul.u32 %v34, 2
  %v36 = vadd.s32 %v35, 1
  %vm37 = vcmp.eq.s32.totalorder %v17, %v36
  %vm38 = vcmp.eq.s32.totalorder %v18, %v36
  %vm39 = vcmp.eq.s32.totalorder %v19, %v36
  %vm40 = vcmp.eq.s32.totalorder %v20, %v36
  %vm41 = vcmp.eq.s32.totalorder %v21, %v36
  %vm42 = vcmp.eq.s32.totalorder %v22, %v36
  %vm43 = vcmp.eq.s32.totalorder %v23, %v36
  %vm44 = vcmp.eq.s32.totalorder %v24, %v36
  %vm45 = vcmp.eq.s32.totalorder %v25, %v36
  %vm46 = vcmp.eq.s32.totalorder %v26, %v36
  %vm47 = vcmp.eq.s32.totalorder %v27, %v36
  %vm48 = vcmp.eq.s32.totalorder %v28, %v36
  %vm49 = vcmp.eq.s32.totalorder %v29, %v36
  %vm50 = vcmp.eq.s32.totalorder %v30, %v36
  %vm51 = vcmp.eq.s32.totalorder %v31, %v36
  %vm52 = vcmp.eq.s32.totalorder %v32, %v36
  %v53 = vsel %vm37, 1, 0
  %v54 = vsel %vm38, 1, 0
  %v55 = vsel %vm39, 1, 0
  %v56 = vsel %vm40, 1, 0
  %v57 = vsel %vm41, 1, 0
  %v58 = vsel %vm42, 1, 0
  %v59 = vsel %vm43, 1, 0
  %v60 = vsel %vm44, 1, 0
  %v61 = vsel %vm45, 1, 0
  %v62 = vsel %vm46, 1, 0
  %v63 = vsel %vm47, 1, 0
  %v64 = vsel %vm48, 1, 0
  %v65 = vsel %vm49, 1, 0
  %v66 = vsel %vm50, 1, 0
  %v67 = vsel %vm51, 1, 0
  %v68 = vsel %vm52, 1, 0
  %v69 = vcvt.s32.f32 %v53
  %v70 = vcvt.s32.f32 %v54
  %v71 = vcvt.s32.f32 %v55
  %v72 = vcvt.s32.f32 %v56
  %v73 = vcvt.s32.f32 %v57
  %v74 = vcvt.s32.f32 %v58
  %v75 = vcvt.s32.f32 %v59
  %v76 = vcvt.s32.f32 %v60
  %v77 = vcvt.s32.f32 %v61
  %v78 = vcvt.s32.f32 %v62
  %v79 = vcvt.s32.f32 %v63
  %v80 = vcvt.s32.f32 %v64
  %v81 = vcvt.s32.f32 %v65
  %v82 = vcvt.s32.f32 %v66
  %v83 = vcvt.s32.f32 %v67
  %v84 = vcvt.s32.f32 %v68
  %vm85 = vcmp.eq.s32.totalorder %v17, %v35
  %vm86 = vcmp.eq.s32.totalorder %v18, %v35
  %vm87 = vcmp.eq.s32.totalorder %v19, %v35
  %vm88 = vcmp.eq.s32.totalorder %v20, %v35
  %vm89 = vcmp.eq.s32.totalorder %v21, %v35
  %vm90 = vcmp.eq.s32.totalorder %v22, %v35
  %vm91 = vcmp.eq.s32.totalorder %v23, %v35
  %vm92 = vcmp.eq.s32.totalorder %v24, %v35
  %vm93 = vcmp.eq.s32.totalorder %v25, %v35
  %vm94 = vcmp.eq.s32.totalorder %v26, %v35
  %vm95 = vcmp.eq.s32.totalorder %v27, %v35
  %vm96 = vcmp.eq.s32.totalorder %v28, %v35
  %vm97 = vcmp.eq.s32.totalorder %v29, %v35
  %vm98 = vcmp.eq.s32.totalorder %v30, %v35
  %vm99 = vcmp.eq.s32.totalorder %v31, %v35
  %vm100 = vcmp.eq.s32.totalorder %v32, %v35
  %v101 = vsel %vm85, 1, 0
  %v102 = vsel %vm86, 1, 0
  %v103 = vsel %vm87, 1, 0
  %v104 = vsel %vm88, 1, 0
  %v105 = vsel %vm89, 1, 0
  %v106 = vsel %vm90, 1, 0
  %v107 = vsel %vm91, 1, 0
  %v108 = vsel %vm92, 1, 0
  %v109 = vsel %vm93, 1, 0
  %v110 = vsel %vm94, 1, 0
  %v111 = vsel %vm95, 1, 0
  %v112 = vsel %vm96, 1, 0
  %v113 = vsel %vm97, 1, 0
  %v114 = vsel %vm98, 1, 0
  %v115 = vsel %vm99, 1, 0
  %v116 = vsel %vm100, 1, 0
  %v117 = vcvt.s32.f32 %v101
  %v118 = vcvt.s32.f32 %v102
  %v119 = vcvt.s32.f32 %v103
  %v120 = vcvt.s32.f32 %v104
  %v121 = vcvt.s32.f32 %v105
  %v122 = vcvt.s32.f32 %v106
  %v123 = vcvt.s32.f32 %v107
  %v124 = vcvt.s32.f32 %v108
  %v125 = vcvt.s32.f32 %v109
  %v126 = vcvt.s32.f32 %v110
  %v127 = vcvt.s32.f32 %v111
  %v128 = vcvt.s32.f32 %v112
  %v129 = vcvt.s32.f32 %v113
  %v130 = vcvt.s32.f32 %v114
  %v131 = vcvt.s32.f32 %v115
  %v132 = vcvt.s32.f32 %v116
  %v133 = vsub.f32 %v69, %v117
  %v134 = vsub.f32 %v70, %v118
  %v135 = vsub.f32 %v71, %v119
  %v136 = vsub.f32 %v72, %v120
  %v137 = vsub.f32 %v73, %v121
  %v138 = vsub.f32 %v74, %v122
  %v139 = vsub.f32 %v75, %v123
  %v140 = vsub.f32 %v76, %v124
  %v141 = vsub.f32 %v77, %v125
  %v142 = vsub.f32 %v78, %v126
  %v143 = vsub.f32 %v79, %v127
  %v144 = vsub.f32 %v80, %v128
  %v145 = vsub.f32 %v81, %v129
  %v146 = vsub.f32 %v82, %v130
  %v147 = vsub.f32 %v83, %v131
  %v148 = vsub.f32 %v84, %v132
  %v149 = vpack.c.bf16 %v14, %v14
  %v150 = vunpack.c.l.bf16 %v149
  %v151 = vsub.f32 %v14, %v150
  %v152 = vpack.c.bf16 %v151, %v151
  %v153 = vunpack.c.l.bf16 %v152
  %v154 = vsub.f32 %v151, %v153
  %155 = vmatprep.subr.mxu0 0.0
  %156 = vmatpush1.msra.mxu0 %v133
  %157 = vmatprep.subr.mxu0 0.0
  %158 = vmatpush1.msra.mxu0 %v134
  %159 = vmatprep.subr.mxu0 0.0
  %160 = vmatpush1.msra.mxu0 %v135
  %161 = vmatprep.subr.mxu0 0.0
  %162 = vmatpush1.msra.mxu0 %v136
  %163 = vmatprep.subr.mxu0 0.0
  %164 = vmatpush1.msra.mxu0 %v137
  %165 = vmatprep.subr.mxu0 0.0
  %166 = vmatpush1.msra.mxu0 %v138
  %167 = vmatprep.subr.mxu0 0.0
  %168 = vmatpush1.msra.mxu0 %v139
  %169 = vmatprep.subr.mxu0 0.0
  %170 = vmatpush1.msra.mxu0 %v140
  %171 = vmatprep.subr.mxu0 0.0
  %172 = vmatpush1.msra.mxu0 %v141
  %173 = vmatprep.subr.mxu0 0.0
  %174 = vmatpush1.msra.mxu0 %v142
  %175 = vmatprep.subr.mxu0 0.0
  %176 = vmatpush1.msra.mxu0 %v143
  %177 = vmatprep.subr.mxu0 0.0
  %178 = vmatpush1.msra.mxu0 %v144
  %179 = vmatprep.subr.mxu0 0.0
  %180 = vmatpush1.msra.mxu0 %v145
  %181 = vmatprep.subr.mxu0 0.0
  %182 = vmatpush1.msra.mxu0 %v146
  %183 = vmatprep.subr.mxu0 0.0
  %184 = vmatpush1.msra.mxu0 %v147
  %185 = vmatprep.subr.mxu0 0.0
  %186 = vmatpush1.msra.mxu0 %v148
  %187 = vmatprep.subr.mxu0 0.0
  %188 = vmatpush1.msra.mxu0 0.0
  %189 = vmatprep.subr.mxu0 0.0
  %190 = vmatpush1.msra.mxu0 0.0
  %191 = vmatprep.subr.mxu0 0.0
  %192 = vmatpush1.msra.mxu0 0.0
  %193 = vmatprep.subr.mxu0 0.0
  %194 = vmatpush1.msra.mxu0 0.0
  %195 = vmatprep.subr.mxu0 0.0
  %196 = vmatpush1.msra.mxu0 0.0
  %197 = vmatprep.subr.mxu0 0.0
  %198 = vmatpush1.msra.mxu0 0.0
  %199 = vmatprep.subr.mxu0 0.0
  %200 = vmatpush1.msra.mxu0 0.0
  %201 = vmatprep.subr.mxu0 0.0
  %202 = vmatpush1.msra.mxu0 0.0
  %203 = vmatprep.subr.mxu0 0.0
  %204 = vmatpush1.msra.mxu0 0.0
  %205 = vmatprep.subr.mxu0 0.0
  %206 = vmatpush1.msra.mxu0 0.0
  %207 = vmatprep.subr.mxu0 0.0
  %208 = vmatpush1.msra.mxu0 0.0
  %209 = vmatprep.subr.mxu0 0.0
  %210 = vmatpush1.msra.mxu0 0.0
  %211 = vmatprep.subr.mxu0 0.0
  %212 = vmatpush1.msra.mxu0 0.0
  %213 = vmatprep.subr.mxu0 0.0
  %214 = vmatpush1.msra.mxu0 0.0
  %215 = vmatprep.subr.mxu0 0.0
  %216 = vmatpush1.msra.mxu0 0.0
  %217 = vmatprep.subr.mxu0 0.0
  %218 = vmatpush1.msra.mxu0 0.0
  %219 = vmatprep.mubr.f32.mxu0 0.0
  %220 = vmatmul.mubr.f32.gmra.mrb[0].mxu0 %v153
  %v221 = vpop.f32.mrb[0].mxu0
  %v222 = vadd.f32 0.0, %v221
  %v223 = vpop.f32.mrb[0].mxu0
  %224 = vdwg.mxu0
  %225 = vmatprep.subr.mxu0 0.0
  %226 = vmatpush1.msra.mxu0 %v133
  %227 = vmatprep.subr.mxu0 0.0
  %228 = vmatpush1.msra.mxu0 %v134
  %229 = vmatprep.subr.mxu0 0.0
  %230 = vmatpush1.msra.mxu0 %v135
  %231 = vmatprep.subr.mxu0 0.0
  %232 = vmatpush1.msra.mxu0 %v136
  %233 = vmatprep.subr.mxu0 0.0
  %234 = vmatpush1.msra.mxu0 %v137
  %235 = vmatprep.subr.mxu0 0.0
  %236 = vmatpush1.msra.mxu0 %v138
  %237 = vmatprep.subr.mxu0 0.0
  %238 = vmatpush1.msra.mxu0 %v139
  %239 = vmatprep.subr.mxu0 0.0
  %240 = vmatpush1.msra.mxu0 %v140
  %241 = vmatprep.subr.mxu0 0.0
  %242 = vmatpush1.msra.mxu0 %v141
  %243 = vmatprep.subr.mxu0 0.0
  %244 = vmatpush1.msra.mxu0 %v142
  %245 = vmatprep.subr.mxu0 0.0
  %246 = vmatpush1.msra.mxu0 %v143
  %247 = vmatprep.subr.mxu0 0.0
  %248 = vmatpush1.msra.mxu0 %v144
  %249 = vmatprep.subr.mxu0 0.0
  %250 = vmatpush1.msra.mxu0 %v145
  %251 = vmatprep.subr.mxu0 0.0
  %252 = vmatpush1.msra.mxu0 %v146
  %253 = vmatprep.subr.mxu0 0.0
  %254 = vmatpush1.msra.mxu0 %v147
  %255 = vmatprep.subr.mxu0 0.0
  %256 = vmatpush1.msra.mxu0 %v148
  %257 = vmatprep.subr.mxu0 0.0
  %258 = vmatpush1.msra.mxu0 0.0
  %259 = vmatprep.subr.mxu0 0.0
  %260 = vmatpush1.msra.mxu0 0.0
  %261 = vmatprep.subr.mxu0 0.0
  %262 = vmatpush1.msra.mxu0 0.0
  %263 = vmatprep.subr.mxu0 0.0
  %264 = vmatpush1.msra.mxu0 0.0
  %265 = vmatprep.subr.mxu0 0.0
  %266 = vmatpush1.msra.mxu0 0.0
  %267 = vmatprep.subr.mxu0 0.0
  %268 = vmatpush1.msra.mxu0 0.0
  %269 = vmatprep.subr.mxu0 0.0
  %270 = vmatpush1.msra.mxu0 0.0
  %271 = vmatprep.subr.mxu0 0.0
  %272 = vmatpush1.msra.mxu0 0.0
  %273 = vmatprep.subr.mxu0 0.0
  %274 = vmatpush1.msra.mxu0 0.0
  %275 = vmatprep.subr.mxu0 0.0
  %276 = vmatpush1.msra.mxu0 0.0
  %277 = vmatprep.subr.mxu0 0.0
  %278 = vmatpush1.msra.mxu0 0.0
  %279 = vmatprep.subr.mxu0 0.0
  %280 = vmatpush1.msra.mxu0 0.0
  %281 = vmatprep.subr.mxu0 0.0
  %282 = vmatpush1.msra.mxu0 0.0
  %283 = vmatprep.subr.mxu0 0.0
  %284 = vmatpush1.msra.mxu0 0.0
  %285 = vmatprep.subr.mxu0 0.0
  %286 = vmatpush1.msra.mxu0 0.0
  %287 = vmatprep.subr.mxu0 0.0
  %288 = vmatpush1.msra.mxu0 0.0
  %289 = vmatprep.mubr.f32.mxu0 0.0
  %290 = vmatmul.mubr.f32.gmra.mrb[0].mxu0 %v150
  %v291 = vpop.f32.mrb[0].mxu0
  %v292 = vadd.f32 %v222, %v291
  %v293 = vpop.f32.mrb[0].mxu0
  %294 = vdwg.mxu0
  %295 = vmatprep.subr.mxu0 0.0
  %296 = vmatpush1.msra.mxu0 %v133
  %297 = vmatprep.subr.mxu0 0.0
  %298 = vmatpush1.msra.mxu0 %v134
  %299 = vmatprep.subr.mxu0 0.0
  %300 = vmatpush1.msra.mxu0 %v135
  %301 = vmatprep.subr.mxu0 0.0
  %302 = vmatpush1.msra.mxu0 %v136
  %303 = vmatprep.subr.mxu0 0.0
  %304 = vmatpush1.msra.mxu0 %v137
  %305 = vmatprep.subr.mxu0 0.0
  %306 = vmatpush1.msra.mxu0 %v138
  %307 = vmatprep.subr.mxu0 0.0
  %308 = vmatpush1.msra.mxu0 %v139
  %309 = vmatprep.subr.mxu0 0.0
  %310 = vmatpush1.msra.mxu0 %v140
  %311 = vmatprep.subr.mxu0 0.0
  %312 = vmatpush1.msra.mxu0 %v141
  %313 = vmatprep.subr.mxu0 0.0
  %314 = vmatpush1.msra.mxu0 %v142
  %315 = vmatprep.subr.mxu0 0.0
  %316 = vmatpush1.msra.mxu0 %v143
  %317 = vmatprep.subr.mxu0 0.0
  %318 = vmatpush1.msra.mxu0 %v144
  %319 = vmatprep.subr.mxu0 0.0
  %320 = vmatpush1.msra.mxu0 %v145
  %321 = vmatprep.subr.mxu0 0.0
  %322 = vmatpush1.msra.mxu0 %v146
  %323 = vmatprep.subr.mxu0 0.0
  %324 = vmatpush1.msra.mxu0 %v147
  %325 = vmatprep.subr.mxu0 0.0
  %326 = vmatpush1.msra.mxu0 %v148
  %327 = vmatprep.subr.mxu0 0.0
  %328 = vmatpush1.msra.mxu0 0.0
  %329 = vmatprep.subr.mxu0 0.0
  %330 = vmatpush1.msra.mxu0 0.0
  %331 = vmatprep.subr.mxu0 0.0
  %332 = vmatpush1.msra.mxu0 0.0
  %333 = vmatprep.subr.mxu0 0.0
  %334 = vmatpush1.msra.mxu0 0.0
  %335 = vmatprep.subr.mxu0 0.0
  %336 = vmatpush1.msra.mxu0 0.0
  %337 = vmatprep.subr.mxu0 0.0
  %338 = vmatpush1.msra.mxu0 0.0
  %339 = vmatprep.subr.mxu0 0.0
  %340 = vmatpush1.msra.mxu0 0.0
  %341 = vmatprep.subr.mxu0 0.0
  %342 = vmatpush1.msra.mxu0 0.0
  %343 = vmatprep.subr.mxu0 0.0
  %344 = vmatpush1.msra.mxu0 0.0
  %345 = vmatprep.subr.mxu0 0.0
  %346 = vmatpush1.msra.mxu0 0.0
  %347 = vmatprep.subr.mxu0 0.0
  %348 = vmatpush1.msra.mxu0 0.0
  %349 = vmatprep.subr.mxu0 0.0
  %350 = vmatpush1.msra.mxu0 0.0
  %351 = vmatprep.subr.mxu0 0.0
  %352 = vmatpush1.msra.mxu0 0.0
  %353 = vmatprep.subr.mxu0 0.0
  %354 = vmatpush1.msra.mxu0 0.0
  %355 = vmatprep.subr.mxu0 0.0
  %356 = vmatpush1.msra.mxu0 0.0
  %357 = vmatprep.subr.mxu0 0.0
  %358 = vmatpush1.msra.mxu0 0.0
  %359 = vmatprep.mubr.f32.mxu0 0.0
  %360 = vmatmul.mubr.f32.gmra.mrb[0].mxu0 %v154
  %v361 = vpop.f32.mrb[0].mxu0
  %v362 = vadd.f32 0.0, %v361
  %v363 = vpop.f32.mrb[0].mxu0
  %364 = vdwg.mxu0
  %v365 = vadd.f32 %v292, %v362
  %v366 = vmax.f32 %v365, 0.0
  %v367 = vand.u32 2147483647, %v365
  %v368 = vsub.f32 0.0, %v367
  %v369 = vmul.f32 %v368, 1.442695
  %v370 = vpow.pop %v369
  %v371 = vadd.f32 %v370, 1.0
  %v372 = vlog2.pop %v371
  %v373 = vmul.f32 %v372, 0.6931472
  %v374 = vadd.f32 %v366, %v373
  %v375 = vsub.f32 %v365, %v374
  %vm376 = vcmp.gt.s32.totalorder %v15, 0
  %v377 = vsel %vm376, -0.19851524, -0.1625415
  %v378 = vsel %vm376, 1.0, 0.5
  %v379 = vmul.f32 %v378, %v374
  %v380 = vadd.f32 %v377, %v379
  %v381 = vsel %vm376, -0.95, -0.05
  %v382 = vmul.f32 %v381, %v365
  %v383 = vadd.f32 %v380, %v382
  %s384 = smul.u32 0, 4
  %v385 = vstv %s384
  %v386 = vadd.s32 %v385, %v17
  %v387 = vmul.u32 %v386, 64
  %v388 = vadd.s32 %v387, %v34
  %vm389 = vcmp.lt.s32.totalorder %v388, 200
  %v390 = vsel %vm389, %v383, 0.0
  %vm391 = vmxor %vm376, 1
  %vm392 = vcmp.ge.f32.partialorder %v375, -0.6931472
  %vm393 = vmand %vm391, %vm392
  %vm394 = vmand %vm393, %vm389
  %v395 = vsel %vm394, 1, 0
  %v396 = vcvt.s32.f32 %v395
  %vm397 = vcmask 519168
  %v398 = vsel %vm397, %v396, 0.0
  %v399 = vrot.slane %v398, 4
  %v400 = vadd.f32 %v398, %v399
  %v401 = vrot.slane %v400, 2
  %v402 = vadd.f32 %v400, %v401
  %v403 = vrot.slane %v402, 1
  %v404 = vadd.f32 %v402, %v403
  %vm405 = vcmask 523264
  %406 = vst.msk [vmem:[%s2] sm:$0xff] %vm405, %v404
  %v407 = vmul.f32 %v390, %v396
  %v408 = vsel %vm397, %v407, 0.0
  %v409 = vrot.slane %v408, 4
  %v410 = vadd.f32 %v408, %v409
  %v411 = vrot.slane %v410, 2
  %v412 = vadd.f32 %v410, %v411
  %v413 = vrot.slane %v412, 1
  %v414 = vadd.f32 %v412, %v413
  %415 = vst.msk [vmem:[%s3] sm:$0xff] %vm405, %v414
  %v416 = vsel %vm397, %v390, 0.0
  %v417 = vrot.slane %v416, 4
  %v418 = vadd.f32 %v416, %v417
  %v419 = vrot.slane %v418, 2
  %v420 = vadd.f32 %v418, %v419
  %v421 = vrot.slane %v420, 1
  %v422 = vadd.f32 %v420, %v421
  %423 = vst.msk [vmem:[%s4] sm:$0xff] %vm405, %v422
  // Predicated region
  $region10: #{_loss.1} parent=0 // pred_check
    _
  $region11: #{_loss.1} parent=0 // pred_check_branch
    %425 = sbr.rel (0) target = $region13
  $region12: #{_loss.1} parent=0 // pred_region
    _
  $region13: #{_loss.1} parent=0 // pred_fallthru
    _
  // Predicated region
  $region14: #{_loss.1} parent=0 // pred_check
    _
  $region15: #{_loss.1} parent=0 // pred_check_branch
    %427 = sbr.rel (0) target = $region17
  $region16: #{_loss.1} parent=0 // pred_region
    _
  $region17: #{_loss.1} parent=0 // pred_fallthru
    _
  // Predicated region
  $region18: #{_loss.1} parent=0 // pred_check
    _
  $region19: #{_loss.1} parent=0 // pred_check_branch
    %429 = sbr.rel (0) target = $region21
  $region20: #{_loss.1} parent=0 // pred_region
    _
  $region21: #{_loss.1} parent=0 // pred_fallthru
    _
  // Predicated region
  $region22: #{_loss.1} parent=0 // pred_check
    _
  $region23: #{_loss.1} parent=0 // pred_check_branch
    %431 = sbr.rel (0) target = $region25
  $region24: #{_loss.1} parent=0 // pred_region
    _
  $region25: #{_loss.1} parent=0 // pred_fallthru
    _
  // Predicated region
  $region26: #{_loss.1} parent=0 // pred_check
    _
  $region27: #{_loss.1} parent=0 // pred_check_branch
    %433 = sbr.rel (0) target = $region29
  $region28: #{_loss.1} parent=0 // pred_region
    _
  $region29: #{_loss.1} parent=0 // pred_fallthru
    _
  // Predicated region
  $region30: #{_loss.1} parent=0 // pred_check
    _
  $region31: #{_loss.1} parent=0 // pred_check_branch
    %435 = sbr.rel (0) target = $region33
  $region32: #{_loss.1} parent=0 // pred_region
    _
  $region33: #{_loss.1} parent=0 // pred_fallthru
    _

</llo_original>
